<compile_context>
chip_gen: v7x
topology: tpu7x:2x2x1
jax: 0.10.0
libtpu: 0.0.40
codegen_flags: <defaults>
</compile_context>

<pallas_src>
import functools

import jax
import jax.numpy as jnp
from jax.experimental import pallas as pl
from jax.experimental.pallas import tpu as pltpu

NUM_CLASSES = 2
FIN = 1          # raw node-feature width (GCNConv(1, 64))
HIDDEN1 = 64     # logical conv1 width
HIDDEN2 = 128    # conv2 width
H1_PAD = 128     # lane-dense padded conv1 width (zero-padded; math unchanged)
OUT_PAD = 128    # lane-dense padded classifier width (sliced to NUM_CLASSES outside)
SUBLANE = 8      # sublane multiple for the graph (pool/output row) dimension


# ----------------------------- fused Pallas kernel ---------------------------

def gcn_fused_kernel(adj_ref, xrow_ref, w1_ref, b1_ref, w2_ref, b2_ref,
                     pool_ref, wlin_ref, blin_ref, o_ref):
    adj = adj_ref[...]                                               # (N, N) f32

    # ---- Layer 1 (exact rank-1 reassociation, valid because FIN == 1):
    #   relu( Â @ (x w1ᵀ) + b1 ) == relu( (Â @ x) w1ᵀ + b1 )
    # Â @ x done lane-dense on VPU (broadcast mul) + XLU (lane reduce); no MXU pass.
    ax = jnp.sum(adj * xrow_ref[...], axis=-1, keepdims=True)        # (N, 1)
    h1 = jnp.maximum(ax * w1_ref[...] + b1_ref[...], 0.0)            # (N, H1_PAD)

    # ---- Layer 2: relu( Â @ (h1 @ W2) + b2 )
    h1w2 = jnp.dot(h1, w2_ref[...], preferred_element_type=jnp.float32)   # (N, HIDDEN2)
    h2 = jnp.maximum(
        jnp.dot(adj, h1w2, preferred_element_type=jnp.float32) + b2_ref[...], 0.0)

    # ---- Readout: global_mean_pool expressed as P @ h2, fused with the Linear head.
    pooled = jnp.dot(pool_ref[...], h2, preferred_element_type=jnp.float32)   # (G_PAD, HIDDEN2)
    o_ref[...] = (jnp.dot(pooled, wlin_ref[...], preferred_element_type=jnp.float32)
                  + blin_ref[...])                                            # (G_PAD, OUT_PAD)


# --------------------------------- wrapper -----------------------------------

def gcn_forward(x, adj_norm, pool_pad, padded):
    """x: (N, 1) node features; adj_norm: (N, N); pool_pad: (G_PAD, N)."""
    n = adj_norm.shape[0]
    g_pad = pool_pad.shape[0]
    x_row = x.reshape(1, n)                      # lane-dense (1, N) row of features

    out_pad = pl.pallas_call(
        gcn_fused_kernel,
        out_shape=jax.ShapeDtypeStruct((g_pad, OUT_PAD), jnp.float32),
        grid=(1,),
        in_specs=[
            pl.BlockSpec((n, n), lambda i: (0, 0)),              # Â
            pl.BlockSpec((1, n), lambda i: (0, 0)),              # x as lane-dense row
            pl.BlockSpec((1, H1_PAD), lambda i: (0, 0)),         # W1 row  (1, 128)
            pl.BlockSpec((1, H1_PAD), lambda i: (0, 0)),         # b1
            pl.BlockSpec((H1_PAD, HIDDEN2), lambda i: (0, 0)),   # W2 (padded rows)
            pl.BlockSpec((1, HIDDEN2), lambda i: (0, 0)),        # b2
            pl.BlockSpec((g_pad, n), lambda i: (0, 0)),          # P  (mean pool, padded rows)
            pl.BlockSpec((HIDDEN2, OUT_PAD), lambda i: (0, 0)),  # W_lin (padded cols)
            pl.BlockSpec((1, OUT_PAD), lambda i: (0, 0)),        # b_lin
        ],
        out_specs=pl.BlockSpec((g_pad, OUT_PAD), lambda i: (0, 0)),
        compiler_params=pltpu.CompilerParams(
            dimension_semantics=("parallel",)),
    )(adj_norm, x_row,
      padded["w1"], padded["b1"], padded["w2"], padded["b2"],
      pool_pad, padded["w_lin"], padded["b_lin"])
    return out_pad                                               # (G_PAD, OUT_PAD) slab


# ------------------------------ plain-JAX glue --------------------------------

def build_norm_adj(edge_index, num_nodes):
    """Dense symmetric D^{-1/2}(A+I)D^{-1/2} (PyG GCNConv normalization)."""
    src, dst = edge_index[0], edge_index[1]
    a = jnp.zeros((num_nodes, num_nodes), jnp.float32)
    a = a.at[dst, src].set(1.0)
    a = a.at[src, dst].set(1.0)                    # symmetrize (undirected graph)
    diag = jnp.arange(num_nodes)
    a = a.at[diag, diag].set(1.0)                  # self-loops (idempotent)
    deg = a.sum(axis=1)
    d_inv_sqrt = 1.0 / jnp.sqrt(deg)
    return d_inv_sqrt[:, None] * a * d_inv_sqrt[None, :]


def build_mean_pool(batch, num_rows):
    """(num_rows, N) mean-pool operator; rows >= num_graphs are all-zero padding."""
    onehot = (batch[None, :] == jnp.arange(num_rows)[:, None]).astype(jnp.float32)
    counts = jnp.maximum(onehot.sum(axis=1, keepdims=True), 1.0)
    return onehot / counts


@functools.partial(jax.jit, static_argnames=("num_nodes", "num_graphs"))
def gcn_pipeline(x, edge_index, batch, padded, num_nodes, num_graphs):
    """Graph prep + fused kernel + output slice, all under one jit (one launch)."""
    adj_norm = build_norm_adj(edge_index, num_nodes)                 # (N, N)
    g_pad = ((num_graphs + SUBLANE - 1) // SUBLANE) * SUBLANE
    pool_pad = build_mean_pool(batch, g_pad)                         # (G_PAD, N)
    out_pad = gcn_forward(x, adj_norm, pool_pad, padded)             # (G_PAD, OUT_PAD)
    return out_pad[:num_graphs, :NUM_CLASSES]                        # logical (G, C)


def glorot(key, shape):
    fan_in, fan_out = shape
    limit = jnp.sqrt(6.0 / (fan_in + fan_out))
    return jax.random.uniform(key, shape, jnp.float32, -limit, limit)


def init_params(key):
    """Logical (unpadded) parameters, matching the PyTorch module shapes."""
    k1, k2, k3, k4, k5, k6 = jax.random.split(key, 6)
    return {
        "w1": glorot(k1, (FIN, HIDDEN1)),                      # GCNConv(1, 64)
        "b1": jax.random.uniform(k4, (HIDDEN1,), jnp.float32, -0.05, 0.05),
        "w2": glorot(k2, (HIDDEN1, HIDDEN2)),                  # GCNConv(64, 128)
        "b2": jax.random.uniform(k5, (HIDDEN2,), jnp.float32, -0.05, 0.05),
        "w_lin": glorot(k3, (HIDDEN2, NUM_CLASSES)),           # Linear(128, 2), stored transposed
        "b_lin": jax.random.uniform(k6, (NUM_CLASSES,), jnp.float32, -0.05, 0.05),
    }


def pad_params(p):
    """Zero-pad to lane-dense (multiple-of-128) widths; forward math is unchanged."""
    w1 = jnp.zeros((FIN, H1_PAD), jnp.float32).at[:, :HIDDEN1].set(p["w1"])       # (1, 128)
    b1 = jnp.zeros((1, H1_PAD), jnp.float32).at[0, :HIDDEN1].set(p["b1"])         # (1, 128)
    w2 = jnp.zeros((H1_PAD, HIDDEN2), jnp.float32).at[:HIDDEN1, :].set(p["w2"])   # (128, 128)
    b2 = p["b2"].reshape(1, HIDDEN2).astype(jnp.float32)                          # (1, 128)
    w_lin = jnp.zeros((HIDDEN2, OUT_PAD), jnp.float32).at[:, :NUM_CLASSES].set(p["w_lin"])
    b_lin = jnp.zeros((1, OUT_PAD), jnp.float32).at[0, :NUM_CLASSES].set(p["b_lin"])
    return {"w1": w1, "b1": b1, "w2": w2, "b2": b2, "w_lin": w_lin, "b_lin": b_lin}


def reference_forward(x, adj_norm, pool, p):
    h1 = jnp.maximum(adj_norm @ (x @ p["w1"]) + p["b1"], 0.0)
    h2 = jnp.maximum(adj_norm @ (h1 @ p["w2"]) + p["b2"], 0.0)
    return (pool @ h2) @ p["w_lin"] + p["b_lin"]


# ----------------------------------- main --------------------------------------

if __name__ == "__main__":
    key = jax.random.PRNGKey(0)
    k_feat, k_params = jax.random.split(key)

    # Eight graphs of 16 nodes each (ring topology), batched into one node set so the
    # Â contraction K = 128 fills an MXU tile edge and launch cost is amortized.
    nodes_per_graph, num_graphs = 16, 8
    num_nodes = nodes_per_graph * num_graphs                 # N = 128
    src_list, dst_list = [], []
    for g in range(num_graphs):
        off = g * nodes_per_graph
        for i in range(nodes_per_graph):
            src_list.append(off + i)
            dst_list.append(off + (i + 1) % nodes_per_graph)
    edge_index = jnp.array([src_list, dst_list], dtype=jnp.int32)        # (2, 128)
    batch = jnp.repeat(jnp.arange(num_graphs, dtype=jnp.int32), nodes_per_graph)

    # Node features (N, 1) — FIN == 1 (matches data.x of the PyTorch module).
    x = jax.random.normal(k_feat, (num_nodes, FIN), dtype=jnp.float32)

    params = init_params(k_params)
    padded = pad_params(params)

    out = gcn_pipeline(x, edge_index, batch, padded, num_nodes, num_graphs)
    out = jax.block_until_ready(out)

    adj_norm = build_norm_adj(edge_index, num_nodes)
    pool = build_mean_pool(batch, num_graphs)
    ref = reference_forward(x, adj_norm, pool, params)
    assert out.shape == (num_graphs, NUM_CLASSES), out.shape
    assert jnp.allclose(out, ref, atol=1e-4, rtol=1e-4), (out, ref)

    print("KERNEL_OK")
</pallas_src>

<mosaic_0001>
module attributes {stable_mosaic.version = 11 : i64} {
  func.func @gcn_fused_kernel(%arg0: i32, %arg1: memref<128x128xf32, #tpu.memory_space<vmem>>, %arg2: memref<1x128xf32, #tpu.memory_space<vmem>>, %arg3: memref<1x128xf32, #tpu.memory_space<vmem>>, %arg4: memref<1x128xf32, #tpu.memory_space<vmem>>, %arg5: memref<128x128xf32, #tpu.memory_space<vmem>>, %arg6: memref<1x128xf32, #tpu.memory_space<vmem>>, %arg7: memref<8x128xf32, #tpu.memory_space<vmem>>, %arg8: memref<128x128xf32, #tpu.memory_space<vmem>>, %arg9: memref<1x128xf32, #tpu.memory_space<vmem>>, %arg10: memref<8x128xf32, #tpu.memory_space<vmem>>) attributes {dimension_semantics = [#tpu.dimension_semantics<parallel>], iteration_bounds = array<i64: 1>, scalar_prefetch = 0 : i64, scratch_operands = 0 : i64, tpu.core_type = #tpu.core_type<tc>, window_params = [{pipeline_mode = #tpu.pipeline_mode<synchronous>, transform_indices = @transform_0, window_bounds = array<i64: 128, 128>}, {pipeline_mode = #tpu.pipeline_mode<synchronous>, transform_indices = @transform_1, window_bounds = array<i64: 1, 128>}, {pipeline_mode = #tpu.pipeline_mode<synchronous>, transform_indices = @transform_2, window_bounds = array<i64: 1, 128>}, {pipeline_mode = #tpu.pipeline_mode<synchronous>, transform_indices = @transform_3, window_bounds = array<i64: 1, 128>}, {pipeline_mode = #tpu.pipeline_mode<synchronous>, transform_indices = @transform_4, window_bounds = array<i64: 128, 128>}, {pipeline_mode = #tpu.pipeline_mode<synchronous>, transform_indices = @transform_5, window_bounds = array<i64: 1, 128>}, {pipeline_mode = #tpu.pipeline_mode<synchronous>, transform_indices = @transform_6, window_bounds = array<i64: 8, 128>}, {pipeline_mode = #tpu.pipeline_mode<synchronous>, transform_indices = @transform_7, window_bounds = array<i64: 128, 128>}, {pipeline_mode = #tpu.pipeline_mode<synchronous>, transform_indices = @transform_8, window_bounds = array<i64: 1, 128>}, {pipeline_mode = #tpu.pipeline_mode<synchronous>, transform_indices = @transform_9, window_bounds = array<i64: 8, 128>}]} {
    %c0 = arith.constant 0 : index
    %c0_0 = arith.constant 0 : index
    %0 = vector.load %arg1[%c0, %c0_0] : memref<128x128xf32, #tpu.memory_space<vmem>>, vector<128x128xf32>
    %c0_1 = arith.constant 0 : index
    %c0_2 = arith.constant 0 : index
    %1 = vector.load %arg2[%c0_1, %c0_2] : memref<1x128xf32, #tpu.memory_space<vmem>>, vector<1x128xf32>
    %2 = vector.broadcast %1 : vector<1x128xf32> to vector<128x128xf32>
    %3 = arith.mulf %0, %2 : vector<128x128xf32>
    %cst = arith.constant dense<0.000000e+00> : vector<128xf32>
    %4 = vector.multi_reduction <add>, %3, %cst [1] : vector<128x128xf32> to vector<128xf32>
    %5 = vector.shape_cast %4 : vector<128xf32> to vector<128x1xf32>
    %c0_3 = arith.constant 0 : index
    %c0_4 = arith.constant 0 : index
    %6 = vector.load %arg3[%c0_3, %c0_4] : memref<1x128xf32, #tpu.memory_space<vmem>>, vector<1x128xf32>
    %7 = vector.broadcast %5 : vector<128x1xf32> to vector<128x128xf32>
    %8 = vector.broadcast %6 : vector<1x128xf32> to vector<128x128xf32>
    %9 = arith.mulf %7, %8 : vector<128x128xf32>
    %c0_5 = arith.constant 0 : index
    %c0_6 = arith.constant 0 : index
    %10 = vector.load %arg4[%c0_5, %c0_6] : memref<1x128xf32, #tpu.memory_space<vmem>>, vector<1x128xf32>
    %11 = vector.broadcast %10 : vector<1x128xf32> to vector<128x128xf32>
    %12 = arith.addf %9, %11 : vector<128x128xf32>
    %cst_7 = arith.constant 0.000000e+00 : f32
    %13 = vector.broadcast %cst_7 : f32 to vector<128x128xf32>
    %14 = arith.maximumf %12, %13 : vector<128x128xf32>
    %c0_8 = arith.constant 0 : index
    %c0_9 = arith.constant 0 : index
    %15 = vector.load %arg5[%c0_8, %c0_9] : memref<128x128xf32, #tpu.memory_space<vmem>>, vector<128x128xf32>
    %cst_10 = arith.constant dense<0.000000e+00> : vector<128x128xf32>
    %16 = tpu.matmul %14, %15, %cst_10 {dimension_numbers = #tpu.dot_dimension_numbers<[1], [0], [0], [1], [0, 0, 1, 1], [], []>} : vector<128x128xf32>, vector<128x128xf32>, vector<128x128xf32> -> vector<128x128xf32>
    %cst_11 = arith.constant dense<0.000000e+00> : vector<128x128xf32>
    %17 = tpu.matmul %0, %16, %cst_11 {dimension_numbers = #tpu.dot_dimension_numbers<[1], [0], [0], [1], [0, 0, 1, 1], [], []>} : vector<128x128xf32>, vector<128x128xf32>, vector<128x128xf32> -> vector<128x128xf32>
    %c0_12 = arith.constant 0 : index
    %c0_13 = arith.constant 0 : index
    %18 = vector.load %arg6[%c0_12, %c0_13] : memref<1x128xf32, #tpu.memory_space<vmem>>, vector<1x128xf32>
    %19 = vector.broadcast %18 : vector<1x128xf32> to vector<128x128xf32>
    %20 = arith.addf %17, %19 : vector<128x128xf32>
    %cst_14 = arith.constant 0.000000e+00 : f32
    %21 = vector.broadcast %cst_14 : f32 to vector<128x128xf32>
    %22 = arith.maximumf %20, %21 : vector<128x128xf32>
    %c0_15 = arith.constant 0 : index
    %c0_16 = arith.constant 0 : index
    %23 = vector.load %arg7[%c0_15, %c0_16] : memref<8x128xf32, #tpu.memory_space<vmem>>, vector<8x128xf32>
    %cst_17 = arith.constant dense<0.000000e+00> : vector<8x128xf32>
    %24 = tpu.matmul %23, %22, %cst_17 {dimension_numbers = #tpu.dot_dimension_numbers<[1], [0], [0], [1], [0, 0, 1, 1], [], []>} : vector<8x128xf32>, vector<128x128xf32>, vector<8x128xf32> -> vector<8x128xf32>
    %c0_18 = arith.constant 0 : index
    %c0_19 = arith.constant 0 : index
    %25 = vector.load %arg8[%c0_18, %c0_19] : memref<128x128xf32, #tpu.memory_space<vmem>>, vector<128x128xf32>
    %cst_20 = arith.constant dense<0.000000e+00> : vector<8x128xf32>
    %26 = tpu.matmul %24, %25, %cst_20 {dimension_numbers = #tpu.dot_dimension_numbers<[1], [0], [0], [1], [0, 0, 1, 1], [], []>} : vector<8x128xf32>, vector<128x128xf32>, vector<8x128xf32> -> vector<8x128xf32>
    %c0_21 = arith.constant 0 : index
    %c0_22 = arith.constant 0 : index
    %27 = vector.load %arg9[%c0_21, %c0_22] : memref<1x128xf32, #tpu.memory_space<vmem>>, vector<1x128xf32>
    %28 = vector.broadcast %27 : vector<1x128xf32> to vector<8x128xf32>
    %29 = arith.addf %26, %28 : vector<8x128xf32>
    %c0_23 = arith.constant 0 : index
    %c0_24 = arith.constant 0 : index
    %30 = vector.load %arg10[%c0_23, %c0_24] : memref<8x128xf32, #tpu.memory_space<vmem>>, vector<8x128xf32>
    tpu.vector_store %arg10[%c0_23, %c0_24], %29 {strides = array<i32>} : memref<8x128xf32, #tpu.memory_space<vmem>>, vector<8x128xf32>,
    return
  }
  func.func @transform_0(%arg0: i32) -> (i32, i32) {
    %c0_i32 = arith.constant 0 : i32
    %c0_i32_0 = arith.constant 0 : i32
    %c0_i32_1 = arith.constant 0 : i32
    return %c0_i32, %c0_i32_0 : i32, i32
  }
  func.func @transform_1(%arg0: i32) -> (i32, i32) {
    %c0_i32 = arith.constant 0 : i32
    %c0_i32_0 = arith.constant 0 : i32
    %c0_i32_1 = arith.constant 0 : i32
    return %c0_i32, %c0_i32_0 : i32, i32
  }
  func.func @transform_2(%arg0: i32) -> (i32, i32) {
    %c0_i32 = arith.constant 0 : i32
    %c0_i32_0 = arith.constant 0 : i32
    %c0_i32_1 = arith.constant 0 : i32
    return %c0_i32, %c0_i32_0 : i32, i32
  }
  func.func @transform_3(%arg0: i32) -> (i32, i32) {
    %c0_i32 = arith.constant 0 : i32
    %c0_i32_0 = arith.constant 0 : i32
    %c0_i32_1 = arith.constant 0 : i32
    return %c0_i32, %c0_i32_0 : i32, i32
  }
  func.func @transform_4(%arg0: i32) -> (i32, i32) {
    %c0_i32 = arith.constant 0 : i32
    %c0_i32_0 = arith.constant 0 : i32
    %c0_i32_1 = arith.constant 0 : i32
    return %c0_i32, %c0_i32_0 : i32, i32
  }
  func.func @transform_5(%arg0: i32) -> (i32, i32) {
    %c0_i32 = arith.constant 0 : i32
    %c0_i32_0 = arith.constant 0 : i32
    %c0_i32_1 = arith.constant 0 : i32
    return %c0_i32, %c0_i32_0 : i32, i32
  }
  func.func @transform_6(%arg0: i32) -> (i32, i32) {
    %c0_i32 = arith.constant 0 : i32
    %c0_i32_0 = arith.constant 0 : i32
    %c0_i32_1 = arith.constant 0 : i32
    return %c0_i32, %c0_i32_0 : i32, i32
  }
  func.func @transform_7(%arg0: i32) -> (i32, i32) {
    %c0_i32 = arith.constant 0 : i32
    %c0_i32_0 = arith.constant 0 : i32
    %c0_i32_1 = arith.constant 0 : i32
    return %c0_i32, %c0_i32_0 : i32, i32
  }
  func.func @transform_8(%arg0: i32) -> (i32, i32) {
    %c0_i32 = arith.constant 0 : i32
    %c0_i32_0 = arith.constant 0 : i32
    %c0_i32_1 = arith.constant 0 : i32
    return %c0_i32, %c0_i32_0 : i32, i32
  }
  func.func @transform_9(%arg0: i32) -> (i32, i32) {
    %c0_i32 = arith.constant 0 : i32
    %c0_i32_0 = arith.constant 0 : i32
    %c0_i32_1 = arith.constant 0 : i32
    return %c0_i32, %c0_i32_0 : i32, i32
  }
}

</mosaic_0001>

<llo_original>
// kernel: gcn_pipeline.1
$region0: #{gcn_pipeline.1}
  #allocation0 [shape = 'u32[]', space=smem, size = 0x4, offset = 0x4, fixed_abs, tag = 'smem constant byte address 0x4 - core index']
  #allocation1 [shape = 'u32[144,128]{1,0:T(1,128)}', space=vmem, size = 0x12000, scoped, tag = 'internal scratch']
  %s0 = inlined_call_operand.vmem [shape: f32[128,128], index: 0, kind: input, shape index: {}]
  %s1 = inlined_call_operand.vmem [shape: f32[1,128], index: 1, kind: input, shape index: {}]
  %s2 = inlined_call_operand.vmem [shape: f32[1,128], index: 2, kind: input, shape index: {}]
  %s3 = inlined_call_operand.vmem [shape: f32[1,128], index: 3, kind: input, shape index: {}]
  %s4 = inlined_call_operand.vmem [shape: f32[128,128], index: 4, kind: input, shape index: {}]
  %s5 = inlined_call_operand.vmem [shape: f32[1,128], index: 5, kind: input, shape index: {}]
  %s6 = inlined_call_operand.vmem [shape: f32[8,128], index: 6, kind: input, shape index: {}]
  %s7 = inlined_call_operand.vmem [shape: f32[128,128], index: 7, kind: input, shape index: {}]
  %s8 = inlined_call_operand.vmem [shape: f32[1,128], index: 8, kind: input, shape index: {}]
  %s9 = inlined_call_operand.vmem [shape: f32[8,128], index: 9, kind: output, shape index: {}]
  %s10 = sld [smem:[#allocation0]]
  $region46: #{gcn_pipeline.1} parent=0
    _
  %s12 = ssub.s32 1, %s10
  %s13 = scalar_select 0, %s12, %s10
  // Predicated region
  $region2: #{gcn_pipeline.1} parent=0 // pred_check
    _
  $region3: #{gcn_pipeline.1} parent=0 // pred_check_branch
    %15 = sbr.rel (0) target = $region5
  $region4: #{gcn_pipeline.1} parent=0 // pred_region
    _
  $region5: #{gcn_pipeline.1} parent=0 // pred_fallthru
    _
  // Predicated region
  $region6: #{gcn_pipeline.1} parent=0 // pred_check
    _
  $region7: #{gcn_pipeline.1} parent=0 // pred_check_branch
    %17 = sbr.rel (0) target = $region9
  $region8: #{gcn_pipeline.1} parent=0 // pred_region
    _
  $region9: #{gcn_pipeline.1} parent=0 // pred_fallthru
    _
  // Predicated region
  $region10: #{gcn_pipeline.1} parent=0 // pred_check
    _
  $region11: #{gcn_pipeline.1} parent=0 // pred_check_branch
    %19 = sbr.rel (0) target = $region13
  $region12: #{gcn_pipeline.1} parent=0 // pred_region
    _
  $region13: #{gcn_pipeline.1} parent=0 // pred_fallthru
    _
  // Predicated region
  $region14: #{gcn_pipeline.1} parent=0 // pred_check
    _
  $region15: #{gcn_pipeline.1} parent=0 // pred_check_branch
    %21 = sbr.rel (0) target = $region17
  $region16: #{gcn_pipeline.1} parent=0 // pred_region
    _
  $region17: #{gcn_pipeline.1} parent=0 // pred_fallthru
    _
  // Predicated region
  $region18: #{gcn_pipeline.1} parent=0 // pred_check
    _
  $region19: #{gcn_pipeline.1} parent=0 // pred_check_branch
    %23 = sbr.rel (0) target = $region21
  $region20: #{gcn_pipeline.1} parent=0 // pred_region
    _
  $region21: #{gcn_pipeline.1} parent=0 // pred_fallthru
    _
  // Predicated region
  $region22: #{gcn_pipeline.1} parent=0 // pred_check
    _
  $region23: #{gcn_pipeline.1} parent=0 // pred_check_branch
    %25 = sbr.rel (0) target = $region25
  $region24: #{gcn_pipeline.1} parent=0 // pred_region
    _
  $region25: #{gcn_pipeline.1} parent=0 // pred_fallthru
    _
  // Predicated region
  $region26: #{gcn_pipeline.1} parent=0 // pred_check
    _
  $region27: #{gcn_pipeline.1} parent=0 // pred_check_branch
    %27 = sbr.rel (0) target = $region29
  $region28: #{gcn_pipeline.1} parent=0 // pred_region
    _
  $region29: #{gcn_pipeline.1} parent=0 // pred_fallthru
    _
  // Predicated region
  $region30: #{gcn_pipeline.1} parent=0 // pred_check
    _
  $region31: #{gcn_pipeline.1} parent=0 // pred_check_branch
    %29 = sbr.rel (0) target = $region33
  $region32: #{gcn_pipeline.1} parent=0 // pred_region
    _
  $region33: #{gcn_pipeline.1} parent=0 // pred_fallthru
    _
  // Predicated region
  $region34: #{gcn_pipeline.1} parent=0 // pred_check
    _
  $region35: #{gcn_pipeline.1} parent=0 // pred_check_branch
    %31 = sbr.rel (0) target = $region37
  $region36: #{gcn_pipeline.1} parent=0 // pred_region
    _
  $region37: #{gcn_pipeline.1} parent=0 // pred_fallthru
    _
  %v32 = vld [vmem:[%s0] sm:$0xff]
  %v33 = vld [vmem:[%s0 + $0x8] sm:$0xff]
  %v34 = vld [vmem:[%s0 + $0x10] sm:$0xff]
  %v35 = vld [vmem:[%s0 + $0x18] sm:$0xff]
  %v36 = vld [vmem:[%s0 + $0x20] sm:$0xff]
  %v37 = vld [vmem:[%s0 + $0x28] sm:$0xff]
  %v38 = vld [vmem:[%s0 + $0x30] sm:$0xff]
  %v39 = vld [vmem:[%s0 + $0x38] sm:$0xff]
  %v40 = vld [vmem:[%s0 + $0x40] sm:$0xff]
  %v41 = vld [vmem:[%s0 + $0x48] sm:$0xff]
  %v42 = vld [vmem:[%s0 + $0x50] sm:$0xff]
  %v43 = vld [vmem:[%s0 + $0x58] sm:$0xff]
  %v44 = vld [vmem:[%s0 + $0x60] sm:$0xff]
  %v45 = vld [vmem:[%s0 + $0x68] sm:$0xff]
  %v46 = vld [vmem:[%s0 + $0x70] sm:$0xff]
  %v47 = vld [vmem:[%s0 + $0x78] sm:$0xff]
  %v48 = vld [vmem:[%s1] sm:$0x1]
  %v50 = vlaneseq
  %v51 = vshrl.u32 %v50, 7
  %v52 = vsub.s32 0, %v51
  %v53 = vrot.slane %v48, %v52
  %v55 = vmul.f32 %v32, %v53
  %v56 = vmul.f32 %v33, %v53
  %v57 = vmul.f32 %v34, %v53
  %v58 = vmul.f32 %v35, %v53
  %v59 = vmul.f32 %v36, %v53
  %v60 = vmul.f32 %v37, %v53
  %v61 = vmul.f32 %v38, %v53
  %v62 = vmul.f32 %v39, %v53
  %v63 = vmul.f32 %v40, %v53
  %v64 = vmul.f32 %v41, %v53
  %v65 = vmul.f32 %v42, %v53
  %v66 = vmul.f32 %v43, %v53
  %v67 = vmul.f32 %v44, %v53
  %v68 = vmul.f32 %v45, %v53
  %v69 = vmul.f32 %v46, %v53
  %v70 = vmul.f32 %v47, %v53
  %71 = vadd.xlane.f32.xlu0 %v55
  %v72 = vpop.xlane.xlu0 %71
  %73 = vadd.xlane.f32.xlu0 %v56
  %v74 = vpop.xlane.xlu0 %73
  %75 = vadd.xlane.f32.xlu0 %v57
  %v76 = vpop.xlane.xlu0 %75
  %77 = vadd.xlane.f32.xlu0 %v58
  %v78 = vpop.xlane.xlu0 %77
  %79 = vadd.xlane.f32.xlu0 %v59
  %v80 = vpop.xlane.xlu0 %79
  %81 = vadd.xlane.f32.xlu0 %v60
  %v82 = vpop.xlane.xlu0 %81
  %83 = vadd.xlane.f32.xlu0 %v61
  %v84 = vpop.xlane.xlu0 %83
  %85 = vadd.xlane.f32.xlu0 %v62
  %v86 = vpop.xlane.xlu0 %85
  %87 = vadd.xlane.f32.xlu0 %v63
  %v88 = vpop.xlane.xlu0 %87
  %89 = vadd.xlane.f32.xlu0 %v64
  %v90 = vpop.xlane.xlu0 %89
  %91 = vadd.xlane.f32.xlu0 %v65
  %v92 = vpop.xlane.xlu0 %91
  %93 = vadd.xlane.f32.xlu0 %v66
  %v94 = vpop.xlane.xlu0 %93
  %95 = vadd.xlane.f32.xlu0 %v67
  %v96 = vpop.xlane.xlu0 %95
  %97 = vadd.xlane.f32.xlu0 %v68
  %v98 = vpop.xlane.xlu0 %97
  %99 = vadd.xlane.f32.xlu0 %v69
  %v100 = vpop.xlane.xlu0 %99
  %101 = vadd.xlane.f32.xlu0 %v70
  %v102 = vpop.xlane.xlu0 %101
  %v103 = vld [vmem:[%s2] sm:$0x1]
  %v105 = vlaneseq
  %v106 = vshrl.u32 %v105, 7
  %v107 = vsub.s32 0, %v106
  %v108 = vrot.slane %v103, %v107
  %v110 = vmul.f32 %v72, %v108
  %v111 = vmul.f32 %v74, %v108
  %v112 = vmul.f32 %v76, %v108
  %v113 = vmul.f32 %v78, %v108
  %v114 = vmul.f32 %v80, %v108
  %v115 = vmul.f32 %v82, %v108
  %v116 = vmul.f32 %v84, %v108
  %v117 = vmul.f32 %v86, %v108
  %v118 = vmul.f32 %v88, %v108
  %v119 = vmul.f32 %v90, %v108
  %v120 = vmul.f32 %v92, %v108
  %v121 = vmul.f32 %v94, %v108
  %v122 = vmul.f32 %v96, %v108
  %v123 = vmul.f32 %v98, %v108
  %v124 = vmul.f32 %v100, %v108
  %v125 = vmul.f32 %v102, %v108
  %v126 = vld [vmem:[%s3] sm:$0x1]
  %v128 = vlaneseq
  %v129 = vshrl.u32 %v128, 7
  %v130 = vsub.s32 0, %v129
  %v131 = vrot.slane %v126, %v130
  %v133 = vadd.f32 %v110, %v131
  %v134 = vadd.f32 %v111, %v131
  %v135 = vadd.f32 %v112, %v131
  %v136 = vadd.f32 %v113, %v131
  %v137 = vadd.f32 %v114, %v131
  %v138 = vadd.f32 %v115, %v131
  %v139 = vadd.f32 %v116, %v131
  %v140 = vadd.f32 %v117, %v131
  %v141 = vadd.f32 %v118, %v131
  %v142 = vadd.f32 %v119, %v131
  %v143 = vadd.f32 %v120, %v131
  %v144 = vadd.f32 %v121, %v131
  %v145 = vadd.f32 %v122, %v131
  %v146 = vadd.f32 %v123, %v131
  %v147 = vadd.f32 %v124, %v131
  %v148 = vadd.f32 %v125, %v131
  %v149 = vmax.f32 %v133, 0.0
  %v150 = vmax.f32 %v134, 0.0
  %v151 = vmax.f32 %v135, 0.0
  %v152 = vmax.f32 %v136, 0.0
  %v153 = vmax.f32 %v137, 0.0
  %v154 = vmax.f32 %v138, 0.0
  %v155 = vmax.f32 %v139, 0.0
  %v156 = vmax.f32 %v140, 0.0
  %v157 = vmax.f32 %v141, 0.0
  %v158 = vmax.f32 %v142, 0.0
  %v159 = vmax.f32 %v143, 0.0
  %v160 = vmax.f32 %v144, 0.0
  %v161 = vmax.f32 %v145, 0.0
  %v162 = vmax.f32 %v146, 0.0
  %v163 = vmax.f32 %v147, 0.0
  %v164 = vmax.f32 %v148, 0.0
  %v165 = vld [vmem:[%s4] sm:$0xff]
  %v166 = vld [vmem:[%s4 + $0x8] sm:$0xff]
  %v167 = vld [vmem:[%s4 + $0x10] sm:$0xff]
  %v168 = vld [vmem:[%s4 + $0x18] sm:$0xff]
  %v169 = vld [vmem:[%s4 + $0x20] sm:$0xff]
  %v170 = vld [vmem:[%s4 + $0x28] sm:$0xff]
  %v171 = vld [vmem:[%s4 + $0x30] sm:$0xff]
  %v172 = vld [vmem:[%s4 + $0x38] sm:$0xff]
  %v173 = vld [vmem:[%s4 + $0x40] sm:$0xff]
  %v174 = vld [vmem:[%s4 + $0x48] sm:$0xff]
  %v175 = vld [vmem:[%s4 + $0x50] sm:$0xff]
  %v176 = vld [vmem:[%s4 + $0x58] sm:$0xff]
  %v177 = vld [vmem:[%s4 + $0x60] sm:$0xff]
  %v178 = vld [vmem:[%s4 + $0x68] sm:$0xff]
  %v179 = vld [vmem:[%s4 + $0x70] sm:$0xff]
  %v180 = vld [vmem:[%s4 + $0x78] sm:$0xff]
  %181 = vmatprep.subr.mxu0 0.0
  %182 = vmatpush1.msra.mxu0 %v165
  %183 = vmatprep.subr.mxu0 0.0
  %184 = vmatpush1.msra.mxu0 %v166
  %185 = vmatprep.subr.mxu0 0.0
  %186 = vmatpush1.msra.mxu0 %v167
  %187 = vmatprep.subr.mxu0 0.0
  %188 = vmatpush1.msra.mxu0 %v168
  %189 = vmatprep.subr.mxu0 0.0
  %190 = vmatpush1.msra.mxu0 %v169
  %191 = vmatprep.subr.mxu0 0.0
  %192 = vmatpush1.msra.mxu0 %v170
  %193 = vmatprep.subr.mxu0 0.0
  %194 = vmatpush1.msra.mxu0 %v171
  %195 = vmatprep.subr.mxu0 0.0
  %196 = vmatpush1.msra.mxu0 %v172
  %197 = vmatprep.subr.mxu0 0.0
  %198 = vmatpush1.msra.mxu0 %v173
  %199 = vmatprep.subr.mxu0 0.0
  %200 = vmatpush1.msra.mxu0 %v174
  %201 = vmatprep.subr.mxu0 0.0
  %202 = vmatpush1.msra.mxu0 %v175
  %203 = vmatprep.subr.mxu0 0.0
  %204 = vmatpush1.msra.mxu0 %v176
  %205 = vmatprep.subr.mxu0 0.0
  %206 = vmatpush1.msra.mxu0 %v177
  %207 = vmatprep.subr.mxu0 0.0
  %208 = vmatpush1.msra.mxu0 %v178
  %209 = vmatprep.subr.mxu0 0.0
  %210 = vmatpush1.msra.mxu0 %v179
  %211 = vmatprep.subr.mxu0 0.0
  %212 = vmatpush1.msra.mxu0 %v180
  %213 = vmatprep.subr.mxu0 0.0
  %214 = vmatpush1.msra.mxu0 0.0
  %215 = vmatprep.subr.mxu0 0.0
  %216 = vmatpush1.msra.mxu0 0.0
  %217 = vmatprep.subr.mxu0 0.0
  %218 = vmatpush1.msra.mxu0 0.0
  %219 = vmatprep.subr.mxu0 0.0
  %220 = vmatpush1.msra.mxu0 0.0
  %221 = vmatprep.subr.mxu0 0.0
  %222 = vmatpush1.msra.mxu0 0.0
  %223 = vmatprep.subr.mxu0 0.0
  %224 = vmatpush1.msra.mxu0 0.0
  %225 = vmatprep.subr.mxu0 0.0
  %226 = vmatpush1.msra.mxu0 0.0
  %227 = vmatprep.subr.mxu0 0.0
  %228 = vmatpush1.msra.mxu0 0.0
  %229 = vmatprep.subr.mxu0 0.0
  %230 = vmatpush1.msra.mxu0 0.0
  %231 = vmatprep.subr.mxu0 0.0
  %232 = vmatpush1.msra.mxu0 0.0
  %233 = vmatprep.subr.mxu0 0.0
  %234 = vmatpush1.msra.mxu0 0.0
  %235 = vmatprep.subr.mxu0 0.0
  %236 = vmatpush1.msra.mxu0 0.0
  %237 = vmatprep.subr.mxu0 0.0
  %238 = vmatpush1.msra.mxu0 0.0
  %239 = vmatprep.subr.mxu0 0.0
  %240 = vmatpush1.msra.mxu0 0.0
  %241 = vmatprep.subr.mxu0 0.0
  %242 = vmatpush1.msra.mxu0 0.0
  %243 = vmatprep.subr.mxu0 0.0
  %244 = vmatpush1.msra.mxu0 0.0
  %245 = vmatprep.mubr.f32.mxu0 0.0
  %246 = vmatmul.mubr.f32.gmra.mrb[0].mxu0 %v149
  %v247 = vpop.f32.mrb[0].mxu0
  %v248 = vadd.f32 0.0, %v247
  %v249 = vpop.f32.mrb[0].mxu0
  %250 = vmatprep.mubr.f32.mxu0 0.0
  %251 = vmatmul.mubr.f32.gmra.mrb[0].mxu0 %v150
  %v252 = vpop.f32.mrb[0].mxu0
  %v253 = vadd.f32 0.0, %v252
  %v254 = vpop.f32.mrb[0].mxu0
  %255 = vmatprep.mubr.f32.mxu0 0.0
  %256 = vmatmul.mubr.f32.gmra.mrb[0].mxu0 %v151
  %v257 = vpop.f32.mrb[0].mxu0
  %v258 = vadd.f32 0.0, %v257
  %v259 = vpop.f32.mrb[0].mxu0
  %260 = vmatprep.mubr.f32.mxu0 0.0
  %261 = vmatmul.mubr.f32.gmra.mrb[0].mxu0 %v152
  %v262 = vpop.f32.mrb[0].mxu0
  %v263 = vadd.f32 0.0, %v262
  %v264 = vpop.f32.mrb[0].mxu0
  %265 = vmatprep.mubr.f32.mxu0 0.0
  %266 = vmatmul.mubr.f32.gmra.mrb[0].mxu0 %v153
  %v267 = vpop.f32.mrb[0].mxu0
  %v268 = vadd.f32 0.0, %v267
  %v269 = vpop.f32.mrb[0].mxu0
  %270 = vmatprep.mubr.f32.mxu0 0.0
  %271 = vmatmul.mubr.f32.gmra.mrb[0].mxu0 %v154
  %v272 = vpop.f32.mrb[0].mxu0
  %v273 = vadd.f32 0.0, %v272
  %v274 = vpop.f32.mrb[0].mxu0
  %275 = vmatprep.mubr.f32.mxu0 0.0
  %276 = vmatmul.mubr.f32.gmra.mrb[0].mxu0 %v155
  %v277 = vpop.f32.mrb[0].mxu0
  %v278 = vadd.f32 0.0, %v277
  %v279 = vpop.f32.mrb[0].mxu0
  %280 = vmatprep.mubr.f32.mxu0 0.0
  %281 = vmatmul.mubr.f32.gmra.mrb[0].mxu0 %v156
  %v282 = vpop.f32.mrb[0].mxu0
  %v283 = vadd.f32 0.0, %v282
  %v284 = vpop.f32.mrb[0].mxu0
  %285 = vmatprep.mubr.f32.mxu0 0.0
  %286 = vmatmul.mubr.f32.gmra.mrb[0].mxu0 %v157
  %v287 = vpop.f32.mrb[0].mxu0
  %v288 = vadd.f32 0.0, %v287
  %v289 = vpop.f32.mrb[0].mxu0
  %290 = vmatprep.mubr.f32.mxu0 0.0
  %291 = vmatmul.mubr.f32.gmra.mrb[0].mxu0 %v158
  %v292 = vpop.f32.mrb[0].mxu0
  %v293 = vadd.f32 0.0, %v292
  %v294 = vpop.f32.mrb[0].mxu0
  %295 = vmatprep.mubr.f32.mxu0 0.0
  %296 = vmatmul.mubr.f32.gmra.mrb[0].mxu0 %v159
  %v297 = vpop.f32.mrb[0].mxu0
  %v298 = vadd.f32 0.0, %v297
  %v299 = vpop.f32.mrb[0].mxu0
  %300 = vmatprep.mubr.f32.mxu0 0.0
  %301 = vmatmul.mubr.f32.gmra.mrb[0].mxu0 %v160
  %v302 = vpop.f32.mrb[0].mxu0
  %v303 = vadd.f32 0.0, %v302
  %v304 = vpop.f32.mrb[0].mxu0
  %305 = vmatprep.mubr.f32.mxu0 0.0
  %306 = vmatmul.mubr.f32.gmra.mrb[0].mxu0 %v161
  %v307 = vpop.f32.mrb[0].mxu0
  %v308 = vadd.f32 0.0, %v307
  %v309 = vpop.f32.mrb[0].mxu0
  %310 = vmatprep.mubr.f32.mxu0 0.0
  %311 = vmatmul.mubr.f32.gmra.mrb[0].mxu0 %v162
  %v312 = vpop.f32.mrb[0].mxu0
  %v313 = vadd.f32 0.0, %v312
  %v314 = vpop.f32.mrb[0].mxu0
  %315 = vmatprep.mubr.f32.mxu0 0.0
  %316 = vmatmul.mubr.f32.gmra.mrb[0].mxu0 %v163
  %v317 = vpop.f32.mrb[0].mxu0
  %v318 = vadd.f32 0.0, %v317
  %v319 = vpop.f32.mrb[0].mxu0
  %320 = vmatprep.mubr.f32.mxu0 0.0
  %321 = vmatmul.mubr.f32.gmra.mrb[0].mxu0 %v164
  %v322 = vpop.f32.mrb[0].mxu0
  %v323 = vadd.f32 0.0, %v322
  %v324 = vpop.f32.mrb[0].mxu0
  %325 = vdwg.mxu0
  %v326 = vld [vmem:[%s5] sm:$0x1]
  %v328 = vlaneseq
  %v329 = vshrl.u32 %v328, 7
  %v330 = vsub.s32 0, %v329
  %v331 = vrot.slane %v326, %v330
  %333 = vmatprep.subr.mxu0 0.0
  %334 = vmatpush1.msra.mxu0 %v248
  %335 = vmatprep.subr.mxu0 0.0
  %336 = vmatpush1.msra.mxu0 %v253
  %337 = vmatprep.subr.mxu0 0.0
  %338 = vmatpush1.msra.mxu0 %v258
  %339 = vmatprep.subr.mxu0 0.0
  %340 = vmatpush1.msra.mxu0 %v263
  %341 = vmatprep.subr.mxu0 0.0
  %342 = vmatpush1.msra.mxu0 %v268
  %343 = vmatprep.subr.mxu0 0.0
  %344 = vmatpush1.msra.mxu0 %v273
  %345 = vmatprep.subr.mxu0 0.0
  %346 = vmatpush1.msra.mxu0 %v278
  %347 = vmatprep.subr.mxu0 0.0
  %348 = vmatpush1.msra.mxu0 %v283
  %349 = vmatprep.subr.mxu0 0.0
  %350 = vmatpush1.msra.mxu0 %v288
  %351 = vmatprep.subr.mxu0 0.0
  %352 = vmatpush1.msra.mxu0 %v293
  %353 = vmatprep.subr.mxu0 0.0
  %354 = vmatpush1.msra.mxu0 %v298
  %355 = vmatprep.subr.mxu0 0.0
  %356 = vmatpush1.msra.mxu0 %v303
  %357 = vmatprep.subr.mxu0 0.0
  %358 = vmatpush1.msra.mxu0 %v308
  %359 = vmatprep.subr.mxu0 0.0
  %360 = vmatpush1.msra.mxu0 %v313
  %361 = vmatprep.subr.mxu0 0.0
  %362 = vmatpush1.msra.mxu0 %v318
  %363 = vmatprep.subr.mxu0 0.0
  %364 = vmatpush1.msra.mxu0 %v323
  %365 = vmatprep.subr.mxu0 0.0
  %366 = vmatpush1.msra.mxu0 0.0
  %367 = vmatprep.subr.mxu0 0.0
  %368 = vmatpush1.msra.mxu0 0.0
  %369 = vmatprep.subr.mxu0 0.0
  %370 = vmatpush1.msra.mxu0 0.0
  %371 = vmatprep.subr.mxu0 0.0
  %372 = vmatpush1.msra.mxu0 0.0
  %373 = vmatprep.subr.mxu0 0.0
  %374 = vmatpush1.msra.mxu0 0.0
  %375 = vmatprep.subr.mxu0 0.0
  %376 = vmatpush1.msra.mxu0 0.0
  %377 = vmatprep.subr.mxu0 0.0
  %378 = vmatpush1.msra.mxu0 0.0
  %379 = vmatprep.subr.mxu0 0.0
  %380 = vmatpush1.msra.mxu0 0.0
  %381 = vmatprep.subr.mxu0 0.0
  %382 = vmatpush1.msra.mxu0 0.0
  %383 = vmatprep.subr.mxu0 0.0
  %384 = vmatpush1.msra.mxu0 0.0
  %385 = vmatprep.subr.mxu0 0.0
  %386 = vmatpush1.msra.mxu0 0.0
  %387 = vmatprep.subr.mxu0 0.0
  %388 = vmatpush1.msra.mxu0 0.0
  %389 = vmatprep.subr.mxu0 0.0
  %390 = vmatpush1.msra.mxu0 0.0
  %391 = vmatprep.subr.mxu0 0.0
  %392 = vmatpush1.msra.mxu0 0.0
  %393 = vmatprep.subr.mxu0 0.0
  %394 = vmatpush1.msra.mxu0 0.0
  %395 = vmatprep.subr.mxu0 0.0
  %396 = vmatpush1.msra.mxu0 0.0
  %397 = vmatprep.mubr.f32.mxu0 0.0
  %398 = vmatmul.mubr.f32.gmra.mrb[0].mxu0 %v32
  %v399 = vpop.f32.mrb[0].mxu0
  %v400 = vadd.f32 %v331, %v399
  %v401 = vpop.f32.mrb[0].mxu0
  %402 = vmatprep.mubr.f32.mxu0 0.0
  %403 = vmatmul.mubr.f32.gmra.mrb[0].mxu0 %v33
  %v404 = vpop.f32.mrb[0].mxu0
  %v405 = vadd.f32 %v331, %v404
  %v406 = vpop.f32.mrb[0].mxu0
  %407 = vmatprep.mubr.f32.mxu0 0.0
  %408 = vmatmul.mubr.f32.gmra.mrb[0].mxu0 %v34
  %v409 = vpop.f32.mrb[0].mxu0
  %v410 = vadd.f32 %v331, %v409
  %v411 = vpop.f32.mrb[0].mxu0
  %412 = vmatprep.mubr.f32.mxu0 0.0
  %413 = vmatmul.mubr.f32.gmra.mrb[0].mxu0 %v35
  %v414 = vpop.f32.mrb[0].mxu0
  %v415 = vadd.f32 %v331, %v414
  %v416 = vpop.f32.mrb[0].mxu0
  %417 = vmatprep.mubr.f32.mxu0 0.0
  %418 = vmatmul.mubr.f32.gmra.mrb[0].mxu0 %v36
  %v419 = vpop.f32.mrb[0].mxu0
  %v420 = vadd.f32 %v331, %v419
  %v421 = vpop.f32.mrb[0].mxu0
  %422 = vmatprep.mubr.f32.mxu0 0.0
  %423 = vmatmul.mubr.f32.gmra.mrb[0].mxu0 %v37
  %v424 = vpop.f32.mrb[0].mxu0
  %v425 = vadd.f32 %v331, %v424
  %v426 = vpop.f32.mrb[0].mxu0
  %427 = vmatprep.mubr.f32.mxu0 0.0
  %428 = vmatmul.mubr.f32.gmra.mrb[0].mxu0 %v38
  %v429 = vpop.f32.mrb[0].mxu0
  %v430 = vadd.f32 %v331, %v429
  %v431 = vpop.f32.mrb[0].mxu0
  %432 = vmatprep.mubr.f32.mxu0 0.0
  %433 = vmatmul.mubr.f32.gmra.mrb[0].mxu0 %v39
  %v434 = vpop.f32.mrb[0].mxu0
  %v435 = vadd.f32 %v331, %v434
  %v436 = vpop.f32.mrb[0].mxu0
  %437 = vmatprep.mubr.f32.mxu0 0.0
  %438 = vmatmul.mubr.f32.gmra.mrb[0].mxu0 %v40
  %v439 = vpop.f32.mrb[0].mxu0
  %v440 = vadd.f32 %v331, %v439
  %v441 = vpop.f32.mrb[0].mxu0
  %442 = vmatprep.mubr.f32.mxu0 0.0
  %443 = vmatmul.mubr.f32.gmra.mrb[0].mxu0 %v41
  %v444 = vpop.f32.mrb[0].mxu0
  %v445 = vadd.f32 %v331, %v444
  %v446 = vpop.f32.mrb[0].mxu0
  %447 = vmatprep.mubr.f32.mxu0 0.0
  %448 = vmatmul.mubr.f32.gmra.mrb[0].mxu0 %v42
  %v449 = vpop.f32.mrb[0].mxu0
  %v450 = vadd.f32 %v331, %v449
  %v451 = vpop.f32.mrb[0].mxu0
  %452 = vmatprep.mubr.f32.mxu0 0.0
  %453 = vmatmul.mubr.f32.gmra.mrb[0].mxu0 %v43
  %v454 = vpop.f32.mrb[0].mxu0
  %v455 = vadd.f32 %v331, %v454
  %v456 = vpop.f32.mrb[0].mxu0
  %457 = vmatprep.mubr.f32.mxu0 0.0
  %458 = vmatmul.mubr.f32.gmra.mrb[0].mxu0 %v44
  %v459 = vpop.f32.mrb[0].mxu0
  %v460 = vadd.f32 %v331, %v459
  %v461 = vpop.f32.mrb[0].mxu0
  %462 = vmatprep.mubr.f32.mxu0 0.0
  %463 = vmatmul.mubr.f32.gmra.mrb[0].mxu0 %v45
  %v464 = vpop.f32.mrb[0].mxu0
  %v465 = vadd.f32 %v331, %v464
  %v466 = vpop.f32.mrb[0].mxu0
  %467 = vmatprep.mubr.f32.mxu0 0.0
  %468 = vmatmul.mubr.f32.gmra.mrb[0].mxu0 %v46
  %v469 = vpop.f32.mrb[0].mxu0
  %v470 = vadd.f32 %v331, %v469
  %v471 = vpop.f32.mrb[0].mxu0
  %472 = vmatprep.mubr.f32.mxu0 0.0
  %473 = vmatmul.mubr.f32.gmra.mrb[0].mxu0 %v47
  %v474 = vpop.f32.mrb[0].mxu0
  %v475 = vadd.f32 %v331, %v474
  %v476 = vpop.f32.mrb[0].mxu0
  %477 = vdwg.mxu0
  %v478 = vmax.f32 %v400, 0.0
  %v479 = vmax.f32 %v405, 0.0
  %v480 = vmax.f32 %v410, 0.0
  %v481 = vmax.f32 %v415, 0.0
  %v482 = vmax.f32 %v420, 0.0
  %v483 = vmax.f32 %v425, 0.0
  %v484 = vmax.f32 %v430, 0.0
  %v485 = vmax.f32 %v435, 0.0
  %v486 = vmax.f32 %v440, 0.0
  %v487 = vmax.f32 %v445, 0.0
  %v488 = vmax.f32 %v450, 0.0
  %v489 = vmax.f32 %v455, 0.0
  %v490 = vmax.f32 %v460, 0.0
  %v491 = vmax.f32 %v465, 0.0
  %v492 = vmax.f32 %v470, 0.0
  %v493 = vmax.f32 %v475, 0.0
  %v494 = vld [vmem:[%s6] sm:$0xff]
  %495 = vmatprep.subr.mxu0 0.0
  %496 = vmatpush1.msra.mxu0 %v478
  %497 = vmatprep.subr.mxu0 0.0
  %498 = vmatpush1.msra.mxu0 %v479
  %499 = vmatprep.subr.mxu0 0.0
  %500 = vmatpush1.msra.mxu0 %v480
  %501 = vmatprep.subr.mxu0 0.0
  %502 = vmatpush1.msra.mxu0 %v481
  %503 = vmatprep.subr.mxu0 0.0
  %504 = vmatpush1.msra.mxu0 %v482
  %505 = vmatprep.subr.mxu0 0.0
  %506 = vmatpush1.msra.mxu0 %v483
  %507 = vmatprep.subr.mxu0 0.0
  %508 = vmatpush1.msra.mxu0 %v484
  %509 = vmatprep.subr.mxu0 0.0
  %510 = vmatpush1.msra.mxu0 %v485
  %511 = vmatprep.subr.mxu0 0.0
  %512 = vmatpush1.msra.mxu0 %v486
  %513 = vmatprep.subr.mxu0 0.0
  %514 = vmatpush1.msra.mxu0 %v487
  %515 = vmatprep.subr.mxu0 0.0
  %516 = vmatpush1.msra.mxu0 %v488
  %517 = vmatprep.subr.mxu0 0.0
  %518 = vmatpush1.msra.mxu0 %v489
  %519 = vmatprep.subr.mxu0 0.0
  %520 = vmatpush1.msra.mxu0 %v490
  %521 = vmatprep.subr.mxu0 0.0
  %522 = vmatpush1.msra.mxu0 %v491
  %523 = vmatprep.subr.mxu0 0.0
  %524 = vmatpush1.msra.mxu0 %v492
  %525 = vmatprep.subr.mxu0 0.0
  %526 = vmatpush1.msra.mxu0 %v493
  %527 = vmatprep.subr.mxu0 0.0
  %528 = vmatpush1.msra.mxu0 0.0
  %529 = vmatprep.subr.mxu0 0.0
  %530 = vmatpush1.msra.mxu0 0.0
  %531 = vmatprep.subr.mxu0 0.0
  %532 = vmatpush1.msra.mxu0 0.0
  %533 = vmatprep.subr.mxu0 0.0
  %534 = vmatpush1.msra.mxu0 0.0
  %535 = vmatprep.subr.mxu0 0.0
  %536 = vmatpush1.msra.mxu0 0.0
  %537 = vmatprep.subr.mxu0 0.0
  %538 = vmatpush1.msra.mxu0 0.0
  %539 = vmatprep.subr.mxu0 0.0
  %540 = vmatpush1.msra.mxu0 0.0
  %541 = vmatprep.subr.mxu0 0.0
  %542 = vmatpush1.msra.mxu0 0.0
  %543 = vmatprep.subr.mxu0 0.0
  %544 = vmatpush1.msra.mxu0 0.0
  %545 = vmatprep.subr.mxu0 0.0
  %546 = vmatpush1.msra.mxu0 0.0
  %547 = vmatprep.subr.mxu0 0.0
  %548 = vmatpush1.msra.mxu0 0.0
  %549 = vmatprep.subr.mxu0 0.0
  %550 = vmatpush1.msra.mxu0 0.0
  %551 = vmatprep.subr.mxu0 0.0
  %552 = vmatpush1.msra.mxu0 0.0
  %553 = vmatprep.subr.mxu0 0.0
  %554 = vmatpush1.msra.mxu0 0.0
  %555 = vmatprep.subr.mxu0 0.0
  %556 = vmatpush1.msra.mxu0 0.0
  %557 = vmatprep.subr.mxu0 0.0
  %558 = vmatpush1.msra.mxu0 0.0
  %559 = vmatprep.mubr.f32.mxu0 0.0
  %560 = vmatmul.mubr.f32.gmra.mrb[0].mxu0 %v494
  %v561 = vpop.f32.mrb[0].mxu0
  %v562 = vadd.f32 0.0, %v561
  %v563 = vpop.f32.mrb[0].mxu0
  %564 = vdwg.mxu0
  %v565 = vld [vmem:[%s7] sm:$0xff]
  %v566 = vld [vmem:[%s7 + $0x8] sm:$0xff]
  %v567 = vld [vmem:[%s7 + $0x10] sm:$0xff]
  %v568 = vld [vmem:[%s7 + $0x18] sm:$0xff]
  %v569 = vld [vmem:[%s7 + $0x20] sm:$0xff]
  %v570 = vld [vmem:[%s7 + $0x28] sm:$0xff]
  %v571 = vld [vmem:[%s7 + $0x30] sm:$0xff]
  %v572 = vld [vmem:[%s7 + $0x38] sm:$0xff]
  %v573 = vld [vmem:[%s7 + $0x40] sm:$0xff]
  %v574 = vld [vmem:[%s7 + $0x48] sm:$0xff]
  %v575 = vld [vmem:[%s7 + $0x50] sm:$0xff]
  %v576 = vld [vmem:[%s7 + $0x58] sm:$0xff]
  %v577 = vld [vmem:[%s7 + $0x60] sm:$0xff]
  %v578 = vld [vmem:[%s7 + $0x68] sm:$0xff]
  %v579 = vld [vmem:[%s7 + $0x70] sm:$0xff]
  %v580 = vld [vmem:[%s7 + $0x78] sm:$0xff]
  %v581 = vld [vmem:[%s8] sm:$0x1]
  %v583 = vlaneseq
  %v584 = vshrl.u32 %v583, 7
  %v585 = vsub.s32 0, %v584
  %v586 = vrot.slane %v581, %v585
  %588 = vmatprep.subr.mxu0 0.0
  %589 = vmatpush1.msra.mxu0 %v565
  %590 = vmatprep.subr.mxu0 0.0
  %591 = vmatpush1.msra.mxu0 %v566
  %592 = vmatprep.subr.mxu0 0.0
  %593 = vmatpush1.msra.mxu0 %v567
  %594 = vmatprep.subr.mxu0 0.0
  %595 = vmatpush1.msra.mxu0 %v568
  %596 = vmatprep.subr.mxu0 0.0
  %597 = vmatpush1.msra.mxu0 %v569
  %598 = vmatprep.subr.mxu0 0.0
  %599 = vmatpush1.msra.mxu0 %v570
  %600 = vmatprep.subr.mxu0 0.0
  %601 = vmatpush1.msra.mxu0 %v571
  %602 = vmatprep.subr.mxu0 0.0
  %603 = vmatpush1.msra.mxu0 %v572
  %604 = vmatprep.subr.mxu0 0.0
  %605 = vmatpush1.msra.mxu0 %v573
  %606 = vmatprep.subr.mxu0 0.0
  %607 = vmatpush1.msra.mxu0 %v574
  %608 = vmatprep.subr.mxu0 0.0
  %609 = vmatpush1.msra.mxu0 %v575
  %610 = vmatprep.subr.mxu0 0.0
  %611 = vmatpush1.msra.mxu0 %v576
  %612 = vmatprep.subr.mxu0 0.0
  %613 = vmatpush1.msra.mxu0 %v577
  %614 = vmatprep.subr.mxu0 0.0
  %615 = vmatpush1.msra.mxu0 %v578
  %616 = vmatprep.subr.mxu0 0.0
  %617 = vmatpush1.msra.mxu0 %v579
  %618 = vmatprep.subr.mxu0 0.0
  %619 = vmatpush1.msra.mxu0 %v580
  %620 = vmatprep.subr.mxu0 0.0
  %621 = vmatpush1.msra.mxu0 0.0
  %622 = vmatprep.subr.mxu0 0.0
  %623 = vmatpush1.msra.mxu0 0.0
  %624 = vmatprep.subr.mxu0 0.0
  %625 = vmatpush1.msra.mxu0 0.0
  %626 = vmatprep.subr.mxu0 0.0
  %627 = vmatpush1.msra.mxu0 0.0
  %628 = vmatprep.subr.mxu0 0.0
  %629 = vmatpush1.msra.mxu0 0.0
  %630 = vmatprep.subr.mxu0 0.0
  %631 = vmatpush1.msra.mxu0 0.0
  %632 = vmatprep.subr.mxu0 0.0
  %633 = vmatpush1.msra.mxu0 0.0
  %634 = vmatprep.subr.mxu0 0.0
  %635 = vmatpush1.msra.mxu0 0.0
  %636 = vmatprep.subr.mxu0 0.0
  %637 = vmatpush1.msra.mxu0 0.0
  %638 = vmatprep.subr.mxu0 0.0
  %639 = vmatpush1.msra.mxu0 0.0
  %640 = vmatprep.subr.mxu0 0.0
  %641 = vmatpush1.msra.mxu0 0.0
  %642 = vmatprep.subr.mxu0 0.0
  %643 = vmatpush1.msra.mxu0 0.0
  %644 = vmatprep.subr.mxu0 0.0
  %645 = vmatpush1.msra.mxu0 0.0
  %646 = vmatprep.subr.mxu0 0.0
  %647 = vmatpush1.msra.mxu0 0.0
  %648 = vmatprep.subr.mxu0 0.0
  %649 = vmatpush1.msra.mxu0 0.0
  %650 = vmatprep.subr.mxu0 0.0
  %651 = vmatpush1.msra.mxu0 0.0
  %652 = vmatprep.mubr.f32.mxu0 0.0
  %653 = vmatmul.mubr.f32.gmra.mrb[0].mxu0 %v562
  %v654 = vpop.f32.mrb[0].mxu0
  %v655 = vadd.f32 %v586, %v654
  %v656 = vpop.f32.mrb[0].mxu0
  %657 = vdwg.mxu0
  %658 = vst [vmem:[%s9] sm:$0xff] %v655
  // Predicated region
  $region38: #{gcn_pipeline.1} parent=0 // pred_check
    _
  $region39: #{gcn_pipeline.1} parent=0 // pred_check_branch
    %660 = sbr.rel (0) target = $region41
  $region40: #{gcn_pipeline.1} parent=0 // pred_region
    _
  $region41: #{gcn_pipeline.1} parent=0 // pred_fallthru
    _
  // Predicated region
  $region42: #{gcn_pipeline.1} parent=0 // pred_check
    _
  $region43: #{gcn_pipeline.1} parent=0 // pred_check_branch
    %662 = sbr.rel (0) target = $region45
  $region44: #{gcn_pipeline.1} parent=0 // pred_region
    _
  $region45: #{gcn_pipeline.1} parent=0 // pred_fallthru
    _

</llo_original>
